<compile_context>
chip_gen: v6e
topology: v6e:2x2x1
jax: 0.10.0
libtpu: 0.0.40
codegen_flags: <defaults>
</compile_context>

<pallas_src>
import functools
import collections

import numpy as np
import jax
import jax.numpy as jnp
from jax.experimental import pallas as pl
from jax.experimental.pallas import tpu as pltpu


CPAD = 128   # every conv GEMM output is padded to 128 channels (lane-dense)


def _round_up(x, m):
    return ((x + m - 1) // m) * m


# ----------------------------------------------------------------------------
# Pallas kernel 1: tiled GEMM + bias (+ optional ReLU)  — conv hot path.
# bf16 operands on the MXU, f32 accumulate, (rows, 128) lane-dense output.
# ----------------------------------------------------------------------------
def _gemm_bias_kernel(x_ref, w_ref, b_ref, o_ref, *, relu):
    acc = jnp.dot(x_ref[...], w_ref[...], preferred_element_type=jnp.float32)
    acc = acc + b_ref[...]
    if relu:
        acc = jnp.maximum(acc, 0.0)
    o_ref[...] = acc.astype(o_ref.dtype)


def pallas_gemm_bias(x, w, b, *, relu, out_dtype, tm=256):
    # x: (M, K) bf16   w: (K, N=128) bf16   b: (1, N) f32  ->  (M, N) out_dtype
    M, K = x.shape
    _, N = w.shape
    tm = min(tm, _round_up(M, 8))
    Mp = _round_up(M, tm)
    if Mp != M:                       # only the ragged last tile is padded
        x = jnp.pad(x, ((0, Mp - M), (0, 0)))
    out = pl.pallas_call(
        functools.partial(_gemm_bias_kernel, relu=relu),
        out_shape=jax.ShapeDtypeStruct((Mp, N), out_dtype),
        grid=(Mp // tm,),
        in_specs=[
            pl.BlockSpec((tm, K), lambda i: (i, 0)),
            pl.BlockSpec((K, N), lambda i: (0, 0)),
            pl.BlockSpec((1, N), lambda i: (0, 0)),
        ],
        out_specs=pl.BlockSpec((tm, N), lambda i: (i, 0)),
        compiler_params=pltpu.CompilerParams(
            dimension_semantics=("parallel",)),
    )(x, w, b)
    return out if Mp == M else out[:M]


def conv2d_nhwc(x, wmat, b, *, cin, ksz, stride, padding, relu, out_dtype):
    # x: (B, H, W, Cx) with Cx >= cin (channel-padded activations, bf16).
    # wmat: (ksz*ksz*cin, CPAD) bf16   b: (1, CPAD) f32
    B, H, W, _ = x.shape
    xs = x[..., :cin]
    if padding:
        xs = jnp.pad(xs, ((0, 0), (padding, padding), (padding, padding), (0, 0)))
    Ho = (H + 2 * padding - ksz) // stride + 1
    Wo = (W + 2 * padding - ksz) // stride + 1
    if ksz == 1 and stride == 1:
        cols = xs.reshape(B * Ho * Wo, cin)            # 1x1 conv: pure reshape
    else:
        # NHWC im2col: channel-last shifted slices, no transposes.
        # TODO(synk): fuse the 3x3 patch gather into the Pallas kernel to avoid
        # writing the kh*kw-expanded buffer through HBM at large resolutions.
        patches = [xs[:, di:di + stride * (Ho - 1) + 1:stride,
                      dj:dj + stride * (Wo - 1) + 1:stride, :]
                   for di in range(ksz) for dj in range(ksz)]
        cols = jnp.concatenate(patches, axis=-1).reshape(
            B * Ho * Wo, ksz * ksz * cin)
    out = pallas_gemm_bias(cols.astype(jnp.bfloat16), wmat, b,
                           relu=relu, out_dtype=out_dtype)
    return out.reshape(B, Ho, Wo, CPAD)


# ----------------------------------------------------------------------------
# Pallas kernel 2: fused reprojection loss (SSIM 3x3 + robust L1) for all four
# predictions + identity noise + min + auto-mask + masked sums.  Grid over
# batch; outputs per-image (masked_sum, mask_count) scalars in SMEM.
# ----------------------------------------------------------------------------
def _fused_loss_kernel(tgt_ref, preds_ref, noise_ref, part_ref,
                       *, C, H, W, ssim_coef, l1_coef):
    y = tgt_ref[0].astype(jnp.float32)                       # (C, Hp, Wp)
    pr = preds_ref[0]                                        # (4C, Hp, Wp)
    nz = noise_ref[0]                                        # (2, H, W)

    def box3(a):                                             # separable 3x3 sum
        r = a[:, :, 0:W] + a[:, :, 1:W + 1] + a[:, :, 2:W + 2]
        return r[:, 0:H, :] + r[:, 1:H + 1, :] + r[:, 2:H + 2, :]

    y_c = y[:, 1:1 + H, 1:1 + W]
    sy = box3(y)
    syy = box3(y * y)
    C1 = 0.01 ** 2
    C2 = 0.03 ** 2

    def loss_map(x):                                         # (C,Hp,Wp)->(H,W)
        x_c = x[:, 1:1 + H, 1:1 + W]
        sx = box3(x)
        sxx = box3(x * x)
        sxy = box3(x * y)
        mu_x = sx / 9.0
        mu_y = sy / 9.0
        sig_x = sxx / 9.0 - mu_x * mu_x
        sig_y = syy / 9.0 - mu_y * mu_y
        sig_xy = sxy / 9.0 - mu_x * mu_y
        ssim_n = (2.0 * mu_x * mu_y + C1) * (2.0 * sig_xy + C2)
        ssim_d = (mu_x * mu_x + mu_y * mu_y + C1) * (sig_x + sig_y + C2)
        ssim_v = jnp.clip((1.0 - ssim_n / ssim_d) * 0.5, 0.0, 1.0)
        l1 = jnp.sqrt((x_c - y_c) * (x_c - y_c) + 1e-6)      # robust_l1
        per_ch = ssim_coef * ssim_v + l1_coef * l1           # (C, H, W)
        return jnp.mean(per_ch, axis=0)                      # channel mean

    maps = [loss_map(pr[p * C:(p + 1) * C].astype(jnp.float32))
            for p in range(4)]
    idl = jnp.minimum(maps[0] + nz[0], maps[1] + nz[1])      # identity (+noise)
    rep = jnp.minimum(maps[2], maps[3])                      # warped
    mask = (rep <= idl).astype(jnp.float32)                  # auto-mask
    part_ref[0, 0] = jnp.sum(rep * mask)
    part_ref[0, 1] = jnp.sum(mask)


def fused_reprojection_masked_loss(target, id_m1, id_p1, wr_m1, wr_p1, noise,
                                   ssim_coef=0.85, l1_coef=0.15):
    B, C, H, W = target.shape
    pad = lambda a: jnp.pad(a, ((0, 0), (0, 0), (1, 1), (1, 1)), mode="reflect")
    tgt = pad(target)
    preds = jnp.concatenate([pad(id_m1), pad(id_p1), pad(wr_m1), pad(wr_p1)],
                            axis=1)                          # (B, 4C, Hp, Wp)
    Hp, Wp = H + 2, W + 2
    parts = pl.pallas_call(
        functools.partial(_fused_loss_kernel, C=C, H=H, W=W,
                          ssim_coef=ssim_coef, l1_coef=l1_coef),
        out_shape=jax.ShapeDtypeStruct((B, 2), jnp.float32),
        grid=(B,),
        in_specs=[
            pl.BlockSpec((1, C, Hp, Wp), lambda b: (b, 0, 0, 0)),
            pl.BlockSpec((1, 4 * C, Hp, Wp), lambda b: (b, 0, 0, 0)),
            pl.BlockSpec((1, 2, H, W), lambda b: (b, 0, 0, 0)),
        ],
        out_specs=pl.BlockSpec((1, 2), lambda b: (b, 0),
                               memory_space=pltpu.MemorySpace.SMEM),
        compiler_params=pltpu.CompilerParams(
            dimension_semantics=("parallel",)),
    )(tgt, preds, noise)
    # tiny (B,)-length final reduction of the per-image partial sums
    return jnp.sum(parts[:, 0]), jnp.sum(parts[:, 1])
    # TODO(synk): at production resolutions also tile rows (with a 1-px halo)
    # inside each image so per-step VMEM stays well under the 32 MiB scoped
    # budget on v7x.


# ----------------------------------------------------------------------------
# Geometry helpers (plain JAX glue)
# ----------------------------------------------------------------------------
def rodrigues(rotv):
    theta = jnp.sqrt(jnp.sum(rotv ** 2, axis=-1, keepdims=True) + 1e-12)  # (B,1)
    axis = rotv / theta
    ct = jnp.cos(theta)[..., None]
    st = jnp.sin(theta)[..., None]
    ax, ay, az = axis[:, 0], axis[:, 1], axis[:, 2]
    zero = jnp.zeros_like(ax)
    Kx = jnp.stack([jnp.stack([zero, -az, ay], -1),
                    jnp.stack([az, zero, -ax], -1),
                    jnp.stack([-ay, ax, zero], -1)], -2)
    outer = axis[:, :, None] * axis[:, None, :]
    I = jnp.eye(3, dtype=rotv.dtype)[None]
    return ct * I + (1.0 - ct) * outer + st * Kx


def to_matrix(rotv, trans, invert):
    B = rotv.shape[0]
    R = rodrigues(rotv)
    t = trans[..., None]
    if invert:
        R = jnp.swapaxes(R, 1, 2)
        t = -jnp.matmul(R, t)
    top = jnp.concatenate([R, t], axis=2)
    bottom = jnp.broadcast_to(jnp.array([[[0., 0., 0., 1.]]], jnp.float32), (B, 1, 4))
    return jnp.concatenate([top, bottom], axis=1)


def coords_grid(B, H, W):
    xs = jnp.linspace(-1.0, 1.0, W)
    ys = jnp.linspace(-1.0, 1.0, H)
    gx, gy = jnp.meshgrid(xs, ys)
    g = jnp.stack([gx, gy], axis=0).astype(jnp.float32)
    return jnp.broadcast_to(g[None], (B, 2, H, W))


def reproject(coords, depth, T, Kb, Kib):
    B, _, H, W = coords.shape
    pts = coords.reshape(B, 3, H * W)
    cam = jnp.matmul(Kib, pts) * depth.reshape(B, 1, H * W)
    R = T[:, :3, :3]
    t = T[:, :3, 3:4]
    P = jnp.matmul(R, cam) + t
    pix = jnp.matmul(Kb, P)
    eps = 1e-7
    px = pix[:, 0] / (pix[:, 2] + eps)
    py = pix[:, 1] / (pix[:, 2] + eps)
    return jnp.stack([px, py], axis=-1).reshape(B, H, W, 2)


def grid_sampler(img, grid):
    # bilinear grid sample, zeros padding, align_corners=True
    # TODO(synk): reference grid_sampler helper not given; PyTorch's
    # F.grid_sample default is align_corners=False — verify against reference.
    B, C, H, W = img.shape
    x = (grid[..., 0] + 1.0) * (W - 1) / 2.0
    y = (grid[..., 1] + 1.0) * (H - 1) / 2.0
    x0 = jnp.floor(x); y0 = jnp.floor(y)
    x1 = x0 + 1.0;     y1 = y0 + 1.0
    wa = (x1 - x) * (y1 - y)
    wb = (x1 - x) * (y - y0)
    wc = (x - x0) * (y1 - y)
    wd = (x - x0) * (y - y0)
    flat = img.reshape(B, C, H * W)

    def gather(xi, yi):
        valid = ((xi >= 0) & (xi <= W - 1) & (yi >= 0) & (yi <= H - 1))
        xc = jnp.clip(xi, 0, W - 1).astype(jnp.int32)
        yc = jnp.clip(yi, 0, H - 1).astype(jnp.int32)
        idx = (yc * W + xc).reshape(B, 1, H * W)
        g = jnp.take_along_axis(flat, jnp.broadcast_to(idx, (B, C, H * W)), axis=2)
        return g.reshape(B, C, H, W) * valid.reshape(B, 1, H, W).astype(img.dtype)

    out = (wa[:, None] * gather(x0, y0) + wb[:, None] * gather(x0, y1) +
           wc[:, None] * gather(x1, y0) + wd[:, None] * gather(x1, y1))
    return out


def out_boundary_mask(coords_proj):
    x = coords_proj[..., 0]
    y = coords_proj[..., 1]
    m = ((jnp.abs(x) > 1.0) | (jnp.abs(y) > 1.0)).astype(jnp.float32)
    return m[:, None]


def bilinear_interp(x, size):
    B, C = x.shape[0], x.shape[1]
    return jax.image.resize(x, (B, C, size[0], size[1]), method="bilinear")


# ----------------------------------------------------------------------------
# Pose network (simplified encoder/decoder; all convs run on the Pallas GEMM)
# ----------------------------------------------------------------------------
# (name, cin, cout, ksz, stride, padding)
POSE_NET_SPECS = [
    ("e1", 6, 16, 3, 2, 1), ("e2", 16, 32, 3, 2, 1),
    ("e3", 32, 64, 3, 2, 1), ("e4", 64, 128, 3, 2, 1),
    ("d0", 128, 64, 1, 1, 0), ("d1", 64, 64, 3, 1, 1),
    ("d2", 64, 64, 3, 1, 1), ("d3", 64, 6, 1, 1, 0),
]


def init_params(key):
    params = {}
    keys = jax.random.split(key, len(POSE_NET_SPECS))
    for k, (name, cin, cout, ksz, _s, _p) in zip(keys, POSE_NET_SPECS):
        std = 1.0 / np.sqrt(cin * ksz * ksz)
        w = jax.random.normal(k, (ksz, ksz, cin, cout), jnp.float32) * std  # HWIO
        wmat = w.reshape(ksz * ksz * cin, cout)
        wmat = jnp.pad(wmat, ((0, 0), (0, CPAD - cout)))     # lane-dense Cout
        params[name + "_w"] = wmat.astype(jnp.bfloat16)
        params[name + "_b"] = jnp.zeros((1, CPAD), jnp.float32)
    return params


def infer_pose_batched(params, x_nhwc, rot_coef, trans_coef):
    # x_nhwc: (2B, h, w, 6) — both frame pairs batched through one trunk pass
    f = x_nhwc.astype(jnp.bfloat16)
    for name, cin, cout, ksz, s, p in POSE_NET_SPECS:
        last = name == "d3"
        f = conv2d_nhwc(f, params[name + "_w"], params[name + "_b"],
                        cin=cin, ksz=ksz, stride=s, padding=p,
                        relu=not last,
                        out_dtype=jnp.float32 if last else jnp.bfloat16)
    out = jnp.mean(f, axis=(1, 2))[:, :6]                    # (2B, 6)
    rotv = rot_coef * out[:, :3]
    trans = trans_coef * out[:, 3:6]
    return rotv, trans


# ----------------------------------------------------------------------------
# VO_Module forward
# ----------------------------------------------------------------------------
def warp_image(inputs, outputs, K, K_inv):
    rgb9 = inputs["rgb"]
    B, _, H, W = rgb9.shape
    coords = jnp.concatenate(
        [coords_grid(B, H, W), jnp.ones((B, 1, H, W), jnp.float32)], axis=1)
    Kb = jnp.broadcast_to(K[None], (B, 3, 3))
    Kib = jnp.broadcast_to(K_inv[None], (B, 3, 3))
    warped = {}
    for f_id in (-1, 1):
        if f_id < 0:
            rgb, invert = rgb9[:, 0:3], True
        else:
            rgb, invert = rgb9[:, 6:9], False
        T = to_matrix(outputs[("rotv", f_id)], outputs[("trans", f_id)], invert)
        coords_proj = reproject(coords, inputs["depth"][:, 1:2], T, Kb, Kib)
        warped[("rgb", f_id)] = grid_sampler(rgb, coords_proj)
        warped[("out_boundary_mask", f_id)] = out_boundary_mask(coords_proj)
    return warped


def compute_loss(cfgs, inputs, outputs, key, K, K_inv):
    B, _, H, W = inputs["rgb"].shape
    target = inputs["rgb"][:, 3:6]
    losses = {}
    for scale in range(cfgs["train_scale"]):
        warped = warp_image(inputs, outputs, K, K_inv)
        key, sub = jax.random.split(key)
        noise = jax.random.normal(sub, (B, 2, H, W), jnp.float32) * 1e-5
        s, c = fused_reprojection_masked_loss(
            target,
            inputs["rgb"][:, 0:3], inputs["rgb"][:, 6:9],
            warped[("rgb", -1)], warped[("rgb", 1)],
            noise)
        losses[("reconstruct_loss", scale)] = (
            cfgs["rec_loss_coef"] * s / (c + 1e-7) / cfgs["train_scale"])
    return losses


def compute_error(inputs, outputs):
    prev_gps = inputs["gps"][:, 0:3].reshape(-1, 3, 1)
    curr_gps = inputs["gps"][:, 3:6].reshape(-1, 3, 1)
    prev_state = inputs["state"][:, 0:4, 0:4]
    curr_state = inputs["state"][:, 4:8, 0:4]
    goal = inputs["goal"][:, 3:6]
    pred_pose = to_matrix(outputs[("rotv", -1)], outputs[("trans", -1)], invert=False)
    pred_state = jnp.matmul(prev_state, pred_pose)
    pred_gps = jnp.matmul(jnp.linalg.inv(pred_state[:, :3, :3]),
                          (goal - pred_state[:, :3, 3])[..., None])
    state_error = jnp.matmul(jnp.linalg.inv(pred_state), curr_state)
    _gps_error = pred_gps - curr_gps  # computed but unused (as in reference)
    R = state_error[:, :3, :3]
    tr = R[:, 0, 0] + R[:, 1, 1] + R[:, 2, 2]
    errors = {}
    errors["rot_error"] = jnp.mean(jnp.arccos(jnp.clip((tr - 1.0) / 2.0, -1.0, 1.0)))
    errors["trans_error"] = jnp.mean(
        jnp.sqrt(jnp.sum(state_error[:, :3, 3] ** 2, axis=-1)))
    return errors


def vo_forward(params, cfgs, inputs, key):
    hfov = float(cfgs["hfov"]) * np.pi / 180.0
    K = jnp.array([[1.0 / np.tan(hfov / 2.0), 0.0, 0.0],
                   [0.0, 1.0 / np.tan(hfov / 2.0), 0.0],
                   [0.0, 0.0, 1.0]], jnp.float32)
    K_inv = jnp.linalg.inv(K)

    B = inputs["rgb"].shape[0]
    outputs = {}
    pose_inputs = bilinear_interp(inputs["rgb"],
                                  [cfgs["pose_height"], cfgs["pose_width"]])
    # batch the two frame pairs through one trunk pass (weights are shared)
    pose_pair = jnp.concatenate([pose_inputs[:, 0:6], pose_inputs[:, 3:9]], axis=0)
    pose_pair = jnp.transpose(pose_pair, (0, 2, 3, 1))       # NCHW -> NHWC
    rotv, trans = infer_pose_batched(params, pose_pair,
                                     cfgs["rot_coef"], cfgs["trans_coef"])
    outputs[("rotv", -1)], outputs[("trans", -1)] = rotv[:B], trans[:B]
    outputs[("rotv", 1)], outputs[("trans", 1)] = rotv[B:], trans[B:]

    losses_pack = collections.OrderedDict()
    losses = compute_loss(cfgs, inputs, outputs, key, K, K_inv)
    for k, v in losses.items():
        name, _s = k
        losses_pack[name] = v if name not in losses_pack else losses_pack[name] + v
    total_loss = sum(v for _k, v in losses.items())
    errors = compute_error(inputs, outputs)
    losses_pack.update(errors)
    return losses_pack, total_loss


# ----------------------------------------------------------------------------
if __name__ == "__main__":
    cfgs = dict(pose_width=16, pose_height=16, rgb_width=16, rgb_height=16,
                dof=6, rot_coef=0.01, trans_coef=0.01, min_depth=0.1,
                max_depth=10.0, train_scale=1, hfov=90.0, rec_loss_coef=1.0)

    key = jax.random.PRNGKey(0)
    kp, kr, kd, kg, kgo, ks1, ks2, ks3, ks4, kn = jax.random.split(key, 10)
    params = init_params(kp)

    B, H, W = 2, 16, 16
    rgb = jax.random.uniform(kr, (B, 9, H, W), jnp.float32)
    depth = jax.random.uniform(kd, (B, 3, H, W), jnp.float32, minval=1.0, maxval=5.0)
    gps = jax.random.normal(kg, (B, 6), jnp.float32) * 0.1
    goal = jax.random.normal(kgo, (B, 6), jnp.float32) * 0.1
    prev_state = to_matrix(jax.random.normal(ks1, (B, 3)) * 0.1,
                           jax.random.normal(ks2, (B, 3)) * 0.1, invert=False)
    curr_state = to_matrix(jax.random.normal(ks3, (B, 3)) * 0.1,
                           jax.random.normal(ks4, (B, 3)) * 0.1, invert=False)
    state = jnp.concatenate([prev_state, curr_state], axis=1)  # (B, 8, 4)

    inputs = {"rgb": rgb, "depth": depth, "gps": gps, "goal": goal, "state": state}

    losses_pack, total_loss = vo_forward(params, cfgs, inputs, kn)
    jax.block_until_ready(total_loss)
    for v in losses_pack.values():
        jax.block_until_ready(v)
    assert np.isfinite(float(total_loss))
    assert np.isfinite(float(losses_pack["rot_error"]))
    assert np.isfinite(float(losses_pack["trans_error"]))
    print("KERNEL_OK")
</pallas_src>

<mosaic_0001>
module attributes {stable_mosaic.version = 11 : i64} {
  func.func @_gemm_bias_kernel(%arg0: i32, %arg1: memref<256x54xbf16, #tpu.memory_space<vmem>>, %arg2: memref<54x128xbf16, #tpu.memory_space<vmem>>, %arg3: memref<1x128xf32, #tpu.memory_space<vmem>>, %arg4: memref<256x128xbf16, #tpu.memory_space<vmem>>) attributes {dimension_semantics = [#tpu.dimension_semantics<parallel>], iteration_bounds = array<i64: 1>, scalar_prefetch = 0 : i64, scratch_operands = 0 : i64, tpu.core_type = #tpu.core_type<tc>, window_params = [{transform_indices = @transform_0, window_bounds = array<i64: 256, 54>}, {pipeline_mode = #tpu.pipeline_mode<synchronous>, transform_indices = @transform_1, window_bounds = array<i64: 54, 128>}, {pipeline_mode = #tpu.pipeline_mode<synchronous>, transform_indices = @transform_2, window_bounds = array<i64: 1, 128>}, {transform_indices = @transform_3, window_bounds = array<i64: 256, 128>}]} {
    %c0 = arith.constant 0 : index
    %c0_0 = arith.constant 0 : index
    %0 = vector.load %arg1[%c0, %c0_0] : memref<256x54xbf16, #tpu.memory_space<vmem>>, vector<256x54xbf16>
    %c0_1 = arith.constant 0 : index
    %c0_2 = arith.constant 0 : index
    %1 = vector.load %arg2[%c0_1, %c0_2] : memref<54x128xbf16, #tpu.memory_space<vmem>>, vector<54x128xbf16>
    %cst = arith.constant dense<0.000000e+00> : vector<256x128xf32>
    %2 = tpu.matmul %0, %1, %cst {dimension_numbers = #tpu.dot_dimension_numbers<[1], [0], [0], [1], [0, 0, 1, 1], [], []>} : vector<256x54xbf16>, vector<54x128xbf16>, vector<256x128xf32> -> vector<256x128xf32>
    %c0_3 = arith.constant 0 : index
    %c0_4 = arith.constant 0 : index
    %3 = vector.load %arg3[%c0_3, %c0_4] : memref<1x128xf32, #tpu.memory_space<vmem>>, vector<1x128xf32>
    %4 = vector.broadcast %3 : vector<1x128xf32> to vector<256x128xf32>
    %5 = arith.addf %2, %4 : vector<256x128xf32>
    %cst_5 = arith.constant 0.000000e+00 : f32
    %6 = vector.broadcast %cst_5 : f32 to vector<256x128xf32>
    %7 = arith.maximumf %5, %6 : vector<256x128xf32>
    %8 = arith.truncf %7 : vector<256x128xf32> to vector<256x128xbf16>
    %c0_6 = arith.constant 0 : index
    %c0_7 = arith.constant 0 : index
    %9 = vector.load %arg4[%c0_6, %c0_7] : memref<256x128xbf16, #tpu.memory_space<vmem>>, vector<256x128xbf16>
    tpu.vector_store %arg4[%c0_6, %c0_7], %8 {strides = array<i32>} : memref<256x128xbf16, #tpu.memory_space<vmem>>, vector<256x128xbf16>,
    return
  }
  func.func @transform_0(%arg0: i32) -> (i32, i32) {
    %c0_i32 = arith.constant 0 : i32
    %c0_i32_0 = arith.constant 0 : i32
    return %arg0, %c0_i32 : i32, i32
  }
  func.func @transform_1(%arg0: i32) -> (i32, i32) {
    %c0_i32 = arith.constant 0 : i32
    %c0_i32_0 = arith.constant 0 : i32
    %c0_i32_1 = arith.constant 0 : i32
    return %c0_i32, %c0_i32_0 : i32, i32
  }
  func.func @transform_2(%arg0: i32) -> (i32, i32) {
    %c0_i32 = arith.constant 0 : i32
    %c0_i32_0 = arith.constant 0 : i32
    %c0_i32_1 = arith.constant 0 : i32
    return %c0_i32, %c0_i32_0 : i32, i32
  }
  func.func @transform_3(%arg0: i32) -> (i32, i32) {
    %c0_i32 = arith.constant 0 : i32
    %c0_i32_0 = arith.constant 0 : i32
    return %arg0, %c0_i32 : i32, i32
  }
}

</mosaic_0001>

<llo_original>
// kernel: tpu_custom_call.1
$region0: #{tpu_custom_call.1}
  #allocation0 [shape = 'u32[]', space=smem, size = 0x4, offset = 0x4, fixed_abs, tag = 'smem constant byte address 0x4 - core index']
  #allocation1 [shape = 'u32[144,128]{1,0:T(1,128)}', space=vmem, size = 0x12000, scoped, tag = 'internal scratch']
  %s0 = inlined_call_operand.vmem [shape: bf16[256,54], index: 0, kind: input, shape index: {}]
  %s1 = inlined_call_operand.vmem [shape: bf16[54,128], index: 1, kind: input, shape index: {}]
  %s2 = inlined_call_operand.vmem [shape: f32[1,128], index: 2, kind: input, shape index: {}]
  %s3 = inlined_call_operand.hbm [shape: bf16[256,128], index: 3, kind: output, shape index: {}]
  %s4 = sld [smem:[#allocation0]]
  $region22: #{tpu_custom_call.1} parent=0
    _
  %s6 = ssub.s32 1, %s4
  %s7 = scalar_select 0, %s6, %s4
  $region1: #{tpu_custom_call.1} parent=0
    #allocation2 [shape = 'u8[65536]{0}', space=vmem, size = 0x10000, scoped, tag = 'output window, operand 0, single buffered']
    #allocation3 [shape = 's32[1]{0}', space=sflag, size = 0x4, scoped, tag = 'scoped memory for tpu_custom_call.1']
    %8 = vsyncpa [#allocation3], 0
    // Predicated region
    $region2: #{tpu_custom_call.1} parent=1 // pred_check
      _
    $region3: #{tpu_custom_call.1} parent=1 // pred_check_branch
      %10 = sbr.rel (0) target = $region5
    $region4: #{tpu_custom_call.1} parent=1 // pred_region
      _
    $region5: #{tpu_custom_call.1} parent=1 // pred_fallthru
      _
    // Predicated region
    $region6: #{tpu_custom_call.1} parent=1 // pred_check
      _
    $region7: #{tpu_custom_call.1} parent=1 // pred_check_branch
      %12 = sbr.rel (0) target = $region9
    $region8: #{tpu_custom_call.1} parent=1 // pred_region
      _
    $region9: #{tpu_custom_call.1} parent=1 // pred_fallthru
      _
    // Predicated region
    $region10: #{tpu_custom_call.1} parent=1 // pred_check
      _
    $region11: #{tpu_custom_call.1} parent=1 // pred_check_branch
      %14 = sbr.rel (0) target = $region13
    $region12: #{tpu_custom_call.1} parent=1 // pred_region
      _
    $region13: #{tpu_custom_call.1} parent=1 // pred_fallthru
      _
    %v16 = vld [vmem:[%s0] sm:$0xf]
    %v17 = vld [vmem:[%s0 + $0x4] sm:$0xf]
    %v18 = vld [vmem:[%s0 + $0x8] sm:$0xf]
    %v19 = vld [vmem:[%s0 + $0xc] sm:$0xf]
    %v20 = vld [vmem:[%s0 + $0x10] sm:$0xf]
    %v21 = vld [vmem:[%s0 + $0x14] sm:$0xf]
    %v22 = vld [vmem:[%s0 + $0x18] sm:$0xf]
    %v23 = vld [vmem:[%s0 + $0x1c] sm:$0xf]
    %v24 = vld [vmem:[%s0 + $0x20] sm:$0xf]
    %v25 = vld [vmem:[%s0 + $0x24] sm:$0xf]
    %v26 = vld [vmem:[%s0 + $0x28] sm:$0xf]
    %v27 = vld [vmem:[%s0 + $0x2c] sm:$0xf]
    %v28 = vld [vmem:[%s0 + $0x30] sm:$0xf]
    %v29 = vld [vmem:[%s0 + $0x34] sm:$0xf]
    %v30 = vld [vmem:[%s0 + $0x38] sm:$0xf]
    %v31 = vld [vmem:[%s0 + $0x3c] sm:$0xf]
    %v32 = vld [vmem:[%s0 + $0x40] sm:$0xf]
    %v33 = vld [vmem:[%s0 + $0x44] sm:$0xf]
    %v34 = vld [vmem:[%s0 + $0x48] sm:$0xf]
    %v35 = vld [vmem:[%s0 + $0x4c] sm:$0xf]
    %v36 = vld [vmem:[%s0 + $0x50] sm:$0xf]
    %v37 = vld [vmem:[%s0 + $0x54] sm:$0xf]
    %v38 = vld [vmem:[%s0 + $0x58] sm:$0xf]
    %v39 = vld [vmem:[%s0 + $0x5c] sm:$0xf]
    %v40 = vld [vmem:[%s0 + $0x60] sm:$0xf]
    %v41 = vld [vmem:[%s0 + $0x64] sm:$0xf]
    %v42 = vld [vmem:[%s0 + $0x68] sm:$0xf]
    %v43 = vld [vmem:[%s0 + $0x6c] sm:$0xf]
    %v44 = vld [vmem:[%s0 + $0x70] sm:$0xf]
    %v45 = vld [vmem:[%s0 + $0x74] sm:$0xf]
    %v46 = vld [vmem:[%s0 + $0x78] sm:$0xf]
    %v47 = vld [vmem:[%s0 + $0x7c] sm:$0xf]
    %v48 = vld [vmem:[%s1] sm:$0xf]
    %v49 = vld [vmem:[%s1 + $0x4] sm:$0xf]
    %v50 = vld [vmem:[%s1 + $0x8] sm:$0xf]
    %v51 = vld [vmem:[%s1 + $0xc] sm:$0xf]
    %v52 = vld [vmem:[%s1 + $0x10] sm:$0xf]
    %v53 = vld [vmem:[%s1 + $0x14] sm:$0xf]
    %v54 = vld [vmem:[%s1 + $0x18] sm:$0x7]
    %v55 = vld [vmem:[%s2] sm:$0x1]
    %v57 = vlaneseq
    %v58 = vshrl.u32 %v57, 7
    %v59 = vsub.s32 0, %v58
    %v60 = vrot.slane %v55, %v59
    %v94 = vunpack.c.l.b16 %v16
    %v95 = vunpack.c.l.b16 %v17
    %v96 = vunpack.c.l.b16 %v18
    %v97 = vunpack.c.l.b16 %v19
    %v98 = vunpack.c.l.b16 %v20
    %v99 = vunpack.c.l.b16 %v21
    %v100 = vunpack.c.l.b16 %v22
    %v101 = vunpack.c.l.b16 %v23
    %v102 = vunpack.c.l.b16 %v24
    %v103 = vunpack.c.l.b16 %v25
    %v104 = vunpack.c.l.b16 %v26
    %v105 = vunpack.c.l.b16 %v27
    %v106 = vunpack.c.l.b16 %v28
    %v107 = vunpack.c.l.b16 %v29
    %v108 = vunpack.c.l.b16 %v30
    %v109 = vunpack.c.l.b16 %v31
    %v110 = vunpack.c.l.b16 %v32
    %v111 = vunpack.c.l.b16 %v33
    %v112 = vunpack.c.l.b16 %v34
    %v113 = vunpack.c.l.b16 %v35
    %v114 = vunpack.c.l.b16 %v36
    %v115 = vunpack.c.l.b16 %v37
    %v116 = vunpack.c.l.b16 %v38
    %v117 = vunpack.c.l.b16 %v39
    %v118 = vunpack.c.l.b16 %v40
    %v119 = vunpack.c.l.b16 %v41
    %v120 = vunpack.c.l.b16 %v42
    %v121 = vunpack.c.l.b16 %v43
    %v122 = vunpack.c.l.b16 %v44
    %v123 = vunpack.c.l.b16 %v45
    %v124 = vunpack.c.l.b16 %v46
    %v125 = vunpack.c.l.b16 %v47
    %v126 = vpack.c.b16 %v95, %v94
    %v127 = vpack.c.b16 %v97, %v96
    %v128 = vpack.c.b16 %v99, %v98
    %v129 = vpack.c.b16 %v101, %v100
    %v130 = vpack.c.b16 %v103, %v102
    %v131 = vpack.c.b16 %v105, %v104
    %v132 = vpack.c.b16 %v107, %v106
    %v133 = vpack.c.b16 %v109, %v108
    %v134 = vpack.c.b16 %v111, %v110
    %v135 = vpack.c.b16 %v113, %v112
    %v136 = vpack.c.b16 %v115, %v114
    %v137 = vpack.c.b16 %v117, %v116
    %v138 = vpack.c.b16 %v119, %v118
    %v139 = vpack.c.b16 %v121, %v120
    %v140 = vpack.c.b16 %v123, %v122
    %v141 = vpack.c.b16 %v125, %v124
    %v149 = vunpack.c.l.b16 %v48
    %v150 = vunpack.c.l.b16 %v49
    %v151 = vunpack.c.l.b16 %v50
    %v152 = vunpack.c.l.b16 %v51
    %v153 = vunpack.c.l.b16 %v52
    %v154 = vunpack.c.l.b16 %v53
    %v155 = vunpack.c.l.b16 %v54
    %v156 = vpack.c.b16 %v150, %v149
    %v157 = vpack.c.b16 %v152, %v151
    %v158 = vpack.c.b16 %v154, %v153
    %v159 = vpack.c.b16 %v155, %v155
    %vm163 = vcmask 441344
    %v165 = vsel %vm163, %v126, 0
    %v168 = vsel %vm163, %v127, 0
    %v171 = vsel %vm163, %v128, 0
    %v174 = vsel %vm163, %v129, 0
    %v177 = vsel %vm163, %v130, 0
    %v180 = vsel %vm163, %v131, 0
    %v183 = vsel %vm163, %v132, 0
    %v186 = vsel %vm163, %v133, 0
    %v189 = vsel %vm163, %v134, 0
    %v192 = vsel %vm163, %v135, 0
    %v195 = vsel %vm163, %v136, 0
    %v198 = vsel %vm163, %v137, 0
    %v201 = vsel %vm163, %v138, 0
    %v204 = vsel %vm163, %v139, 0
    %v207 = vsel %vm163, %v140, 0
    %v210 = vsel %vm163, %v141, 0
    %vm212 = vcmask 1042432
    %v214 = vsel %vm212, %v159, 0
    %216 = vmatprep.subr.bf16.mxu0 0
    %217 = vmatpush1.bf16.msra.mxu0 0
    %218 = vmatprep.subr.bf16.mxu0 0
    %219 = vmatpush1.bf16.msra.mxu0 0
    %220 = vmatprep.subr.bf16.mxu0 0
    %221 = vmatpush1.bf16.msra.mxu0 0
    %222 = vmatprep.subr.bf16.mxu0 0
    %223 = vmatpush1.bf16.msra.mxu0 0
    %224 = vmatprep.subr.bf16.mxu0 0
    %225 = vmatpush1.bf16.msra.mxu0 %v214
    %226 = vmatprep.subr.bf16.mxu0 0
    %227 = vmatpush1.bf16.msra.mxu0 %v158
    %228 = vmatprep.subr.bf16.mxu0 0
    %229 = vmatpush1.bf16.msra.mxu0 %v157
    %230 = vmatprep.subr.bf16.mxu0 0
    %231 = vmatpush1.bf16.msra.mxu0 %v156
    %232 = vmatprep.subr.bf16.mxu0 0
    %233 = vmatpush2.bf16.msra.mxu0 0
    %234 = vmatprep.subr.bf16.mxu0 0
    %235 = vmatpush2.bf16.msra.mxu0 0
    %236 = vmatprep.subr.bf16.mxu0 0
    %237 = vmatpush2.bf16.msra.mxu0 0
    %238 = vmatprep.subr.bf16.mxu0 0
    %239 = vmatpush2.bf16.msra.mxu0 0
    %240 = vmatprep.subr.bf16.mxu0 0
    %241 = vmatpush2.bf16.msra.mxu0 0
    %242 = vmatprep.subr.bf16.mxu0 0
    %243 = vmatpush2.bf16.msra.mxu0 0
    %244 = vmatprep.subr.bf16.mxu0 0
    %245 = vmatpush2.bf16.msra.mxu0 0
    %246 = vmatprep.subr.bf16.mxu0 0
    %247 = vmatpush2.bf16.msra.mxu0 0
    %248 = vmatprep.mubr.bf16.mxu0 0
    %249 = vmatmul.mubr.bf16.gmra.mxu0 %v165
    %v250 = vpop.f32.mrf.mxu0
    %v251 = vadd.f32 %v60, %v250
    %v252 = vpop.f32.mrf.mxu0
    %v253 = vpop.f32.mrf.mxu0
    %v254 = vadd.f32 %v60, %v253
    %v255 = vpop.f32.mrf.mxu0
    %256 = vmatprep.mubr.bf16.mxu0 0
    %257 = vmatmul.mubr.bf16.gmra.mxu0 %v168
    %v258 = vpop.f32.mrf.mxu0
    %v259 = vadd.f32 %v60, %v258
    %v260 = vpop.f32.mrf.mxu0
    %v261 = vpop.f32.mrf.mxu0
    %v262 = vadd.f32 %v60, %v261
    %v263 = vpop.f32.mrf.mxu0
    %264 = vmatprep.mubr.bf16.mxu0 0
    %265 = vmatmul.mubr.bf16.gmra.mxu0 %v171
    %v266 = vpop.f32.mrf.mxu0
    %v267 = vadd.f32 %v60, %v266
    %v268 = vpop.f32.mrf.mxu0
    %v269 = vpop.f32.mrf.mxu0
    %v270 = vadd.f32 %v60, %v269
    %v271 = vpop.f32.mrf.mxu0
    %272 = vmatprep.mubr.bf16.mxu0 0
    %273 = vmatmul.mubr.bf16.gmra.mxu0 %v174
    %v274 = vpop.f32.mrf.mxu0
    %v275 = vadd.f32 %v60, %v274
    %v276 = vpop.f32.mrf.mxu0
    %v277 = vpop.f32.mrf.mxu0
    %v278 = vadd.f32 %v60, %v277
    %v279 = vpop.f32.mrf.mxu0
    %280 = vmatprep.mubr.bf16.mxu0 0
    %281 = vmatmul.mubr.bf16.gmra.mxu0 %v177
    %v282 = vpop.f32.mrf.mxu0
    %v283 = vadd.f32 %v60, %v282
    %v284 = vpop.f32.mrf.mxu0
    %v285 = vpop.f32.mrf.mxu0
    %v286 = vadd.f32 %v60, %v285
    %v287 = vpop.f32.mrf.mxu0
    %288 = vmatprep.mubr.bf16.mxu0 0
    %289 = vmatmul.mubr.bf16.gmra.mxu0 %v180
    %v290 = vpop.f32.mrf.mxu0
    %v291 = vadd.f32 %v60, %v290
    %v292 = vpop.f32.mrf.mxu0
    %v293 = vpop.f32.mrf.mxu0
    %v294 = vadd.f32 %v60, %v293
    %v295 = vpop.f32.mrf.mxu0
    %296 = vmatprep.mubr.bf16.mxu0 0
    %297 = vmatmul.mubr.bf16.gmra.mxu0 %v183
    %v298 = vpop.f32.mrf.mxu0
    %v299 = vadd.f32 %v60, %v298
    %v300 = vpop.f32.mrf.mxu0
    %v301 = vpop.f32.mrf.mxu0
    %v302 = vadd.f32 %v60, %v301
    %v303 = vpop.f32.mrf.mxu0
    %304 = vmatprep.mubr.bf16.mxu0 0
    %305 = vmatmul.mubr.bf16.gmra.mxu0 %v186
    %v306 = vpop.f32.mrf.mxu0
    %v307 = vadd.f32 %v60, %v306
    %v308 = vpop.f32.mrf.mxu0
    %v309 = vpop.f32.mrf.mxu0
    %v310 = vadd.f32 %v60, %v309
    %v311 = vpop.f32.mrf.mxu0
    %312 = vmatprep.mubr.bf16.mxu0 0
    %313 = vmatmul.mubr.bf16.gmra.mxu0 %v189
    %v314 = vpop.f32.mrf.mxu0
    %v315 = vadd.f32 %v60, %v314
    %v316 = vpop.f32.mrf.mxu0
    %v317 = vpop.f32.mrf.mxu0
    %v318 = vadd.f32 %v60, %v317
    %v319 = vpop.f32.mrf.mxu0
    %320 = vmatprep.mubr.bf16.mxu0 0
    %321 = vmatmul.mubr.bf16.gmra.mxu0 %v192
    %v322 = vpop.f32.mrf.mxu0
    %v323 = vadd.f32 %v60, %v322
    %v324 = vpop.f32.mrf.mxu0
    %v325 = vpop.f32.mrf.mxu0
    %v326 = vadd.f32 %v60, %v325
    %v327 = vpop.f32.mrf.mxu0
    %328 = vmatprep.mubr.bf16.mxu0 0
    %329 = vmatmul.mubr.bf16.gmra.mxu0 %v195
    %v330 = vpop.f32.mrf.mxu0
    %v331 = vadd.f32 %v60, %v330
    %v332 = vpop.f32.mrf.mxu0
    %v333 = vpop.f32.mrf.mxu0
    %v334 = vadd.f32 %v60, %v333
    %v335 = vpop.f32.mrf.mxu0
    %336 = vmatprep.mubr.bf16.mxu0 0
    %337 = vmatmul.mubr.bf16.gmra.mxu0 %v198
    %v338 = vpop.f32.mrf.mxu0
    %v339 = vadd.f32 %v60, %v338
    %v340 = vpop.f32.mrf.mxu0
    %v341 = vpop.f32.mrf.mxu0
    %v342 = vadd.f32 %v60, %v341
    %v343 = vpop.f32.mrf.mxu0
    %344 = vmatprep.mubr.bf16.mxu0 0
    %345 = vmatmul.mubr.bf16.gmra.mxu0 %v201
    %v346 = vpop.f32.mrf.mxu0
    %v347 = vadd.f32 %v60, %v346
    %v348 = vpop.f32.mrf.mxu0
    %v349 = vpop.f32.mrf.mxu0
    %v350 = vadd.f32 %v60, %v349
    %v351 = vpop.f32.mrf.mxu0
    %352 = vmatprep.mubr.bf16.mxu0 0
    %353 = vmatmul.mubr.bf16.gmra.mxu0 %v204
    %v354 = vpop.f32.mrf.mxu0
    %v355 = vadd.f32 %v60, %v354
    %v356 = vpop.f32.mrf.mxu0
    %v357 = vpop.f32.mrf.mxu0
    %v358 = vadd.f32 %v60, %v357
    %v359 = vpop.f32.mrf.mxu0
    %360 = vmatprep.mubr.bf16.mxu0 0
    %361 = vmatmul.mubr.bf16.gmra.mxu0 %v207
    %v362 = vpop.f32.mrf.mxu0
    %v363 = vadd.f32 %v60, %v362
    %v364 = vpop.f32.mrf.mxu0
    %v365 = vpop.f32.mrf.mxu0
    %v366 = vadd.f32 %v60, %v365
    %v367 = vpop.f32.mrf.mxu0
    %368 = vmatprep.mubr.bf16.mxu0 0
    %369 = vmatmul.mubr.bf16.gmra.mxu0 %v210
    %v370 = vpop.f32.mrf.mxu0
    %v371 = vadd.f32 %v60, %v370
    %v372 = vpop.f32.mrf.mxu0
    %v373 = vpop.f32.mrf.mxu0
    %v374 = vadd.f32 %v60, %v373
    %v375 = vpop.f32.mrf.mxu0
    %376 = vdwg.mxu0
    %v377 = vmax.f32 %v251, 0.0
    %v378 = vmax.f32 %v254, 0.0
    %v379 = vmax.f32 %v259, 0.0
    %v380 = vmax.f32 %v262, 0.0
    %v381 = vmax.f32 %v267, 0.0
    %v382 = vmax.f32 %v270, 0.0
    %v383 = vmax.f32 %v275, 0.0
    %v384 = vmax.f32 %v278, 0.0
    %v385 = vmax.f32 %v283, 0.0
    %v386 = vmax.f32 %v286, 0.0
    %v387 = vmax.f32 %v291, 0.0
    %v388 = vmax.f32 %v294, 0.0
    %v389 = vmax.f32 %v299, 0.0
    %v390 = vmax.f32 %v302, 0.0
    %v391 = vmax.f32 %v307, 0.0
    %v392 = vmax.f32 %v310, 0.0
    %v393 = vmax.f32 %v315, 0.0
    %v394 = vmax.f32 %v318, 0.0
    %v395 = vmax.f32 %v323, 0.0
    %v396 = vmax.f32 %v326, 0.0
    %v397 = vmax.f32 %v331, 0.0
    %v398 = vmax.f32 %v334, 0.0
    %v399 = vmax.f32 %v339, 0.0
    %v400 = vmax.f32 %v342, 0.0
    %v401 = vmax.f32 %v347, 0.0
    %v402 = vmax.f32 %v350, 0.0
    %v403 = vmax.f32 %v355, 0.0
    %v404 = vmax.f32 %v358, 0.0
    %v405 = vmax.f32 %v363, 0.0
    %v406 = vmax.f32 %v366, 0.0
    %v407 = vmax.f32 %v371, 0.0
    %v408 = vmax.f32 %v374, 0.0
    %v409 = vpack.c.bf16 %v378, %v377
    %v410 = vpack.c.bf16 %v380, %v379
    %v411 = vpack.c.bf16 %v382, %v381
    %v412 = vpack.c.bf16 %v384, %v383
    %v413 = vpack.c.bf16 %v386, %v385
    %v414 = vpack.c.bf16 %v388, %v387
    %v415 = vpack.c.bf16 %v390, %v389
    %v416 = vpack.c.bf16 %v392, %v391
    %v417 = vpack.c.bf16 %v394, %v393
    %v418 = vpack.c.bf16 %v396, %v395
    %v419 = vpack.c.bf16 %v398, %v397
    %v420 = vpack.c.bf16 %v400, %v399
    %v421 = vpack.c.bf16 %v402, %v401
    %v422 = vpack.c.bf16 %v404, %v403
    %v423 = vpack.c.bf16 %v406, %v405
    %v424 = vpack.c.bf16 %v408, %v407
    %v441 = vunpack.c.l.b16 %v409
    %v442 = vunpack.c.h.b16 %v409
    %v443 = vunpack.c.l.b16 %v410
    %v444 = vunpack.c.h.b16 %v410
    %v445 = vunpack.c.l.b16 %v411
    %v446 = vunpack.c.h.b16 %v411
    %v447 = vunpack.c.l.b16 %v412
    %v448 = vunpack.c.h.b16 %v412
    %v449 = vunpack.c.l.b16 %v413
    %v450 = vunpack.c.h.b16 %v413
    %v451 = vunpack.c.l.b16 %v414
    %v452 = vunpack.c.h.b16 %v414
    %v453 = vunpack.c.l.b16 %v415
    %v454 = vunpack.c.h.b16 %v415
    %v455 = vunpack.c.l.b16 %v416
    %v456 = vunpack.c.h.b16 %v416
    %v457 = vunpack.c.l.b16 %v417
    %v458 = vunpack.c.h.b16 %v417
    %v459 = vunpack.c.l.b16 %v418
    %v460 = vunpack.c.h.b16 %v418
    %v461 = vunpack.c.l.b16 %v419
    %v462 = vunpack.c.h.b16 %v419
    %v463 = vunpack.c.l.b16 %v420
    %v464 = vunpack.c.h.b16 %v420
    %v465 = vunpack.c.l.b16 %v421
    %v466 = vunpack.c.h.b16 %v421
    %v467 = vunpack.c.l.b16 %v422
    %v468 = vunpack.c.h.b16 %v422
    %v469 = vunpack.c.l.b16 %v423
    %v470 = vunpack.c.h.b16 %v423
    %v471 = vunpack.c.l.b16 %v424
    %v472 = vunpack.c.h.b16 %v424
    %v473 = vpack.c.b16 %v441, %v441
    %v474 = vpack.c.b16 %v442, %v442
    %v475 = vpack.c.b16 %v443, %v443
    %v476 = vpack.c.b16 %v444, %v444
    %v477 = vpack.c.b16 %v445, %v445
    %v478 = vpack.c.b16 %v446, %v446
    %v479 = vpack.c.b16 %v447, %v447
    %v480 = vpack.c.b16 %v448, %v448
    %v481 = vpack.c.b16 %v449, %v449
    %v482 = vpack.c.b16 %v450, %v450
    %v483 = vpack.c.b16 %v451, %v451
    %v484 = vpack.c.b16 %v452, %v452
    %v485 = vpack.c.b16 %v453, %v453
    %v486 = vpack.c.b16 %v454, %v454
    %v487 = vpack.c.b16 %v455, %v455
    %v488 = vpack.c.b16 %v456, %v456
    %v489 = vpack.c.b16 %v457, %v457
    %v490 = vpack.c.b16 %v458, %v458
    %v491 = vpack.c.b16 %v459, %v459
    %v492 = vpack.c.b16 %v460, %v460
    %v493 = vpack.c.b16 %v461, %v461
    %v494 = vpack.c.b16 %v462, %v462
    %v495 = vpack.c.b16 %v463, %v463
    %v496 = vpack.c.b16 %v464, %v464
    %v497 = vpack.c.b16 %v465, %v465
    %v498 = vpack.c.b16 %v466, %v466
    %v499 = vpack.c.b16 %v467, %v467
    %v500 = vpack.c.b16 %v468, %v468
    %v501 = vpack.c.b16 %v469, %v469
    %v502 = vpack.c.b16 %v470, %v470
    %v503 = vpack.c.b16 %v471, %v471
    %v504 = vpack.c.b16 %v472, %v472
    %537 = vst [vmem:[#allocation2] sm:$0xf] %v473
    %538 = vst [vmem:[#allocation2 + $0x4] sm:$0xf] %v474
    %539 = vst [vmem:[#allocation2 + $0x8] sm:$0xf] %v475
    %540 = vst [vmem:[#allocation2 + $0xc] sm:$0xf] %v476
    %541 = vst [vmem:[#allocation2 + $0x10] sm:$0xf] %v477
    %542 = vst [vmem:[#allocation2 + $0x14] sm:$0xf] %v478
    %543 = vst [vmem:[#allocation2 + $0x18] sm:$0xf] %v479
    %544 = vst [vmem:[#allocation2 + $0x1c] sm:$0xf] %v480
    %545 = vst [vmem:[#allocation2 + $0x20] sm:$0xf] %v481
    %546 = vst [vmem:[#allocation2 + $0x24] sm:$0xf] %v482
    %547 = vst [vmem:[#allocation2 + $0x28] sm:$0xf] %v483
    %548 = vst [vmem:[#allocation2 + $0x2c] sm:$0xf] %v484
    %549 = vst [vmem:[#allocation2 + $0x30] sm:$0xf] %v485
    %550 = vst [vmem:[#allocation2 + $0x34] sm:$0xf] %v486
    %551 = vst [vmem:[#allocation2 + $0x38] sm:$0xf] %v487
    %552 = vst [vmem:[#allocation2 + $0x3c] sm:$0xf] %v488
    %553 = vst [vmem:[#allocation2 + $0x40] sm:$0xf] %v489
    %554 = vst [vmem:[#allocation2 + $0x44] sm:$0xf] %v490
    %555 = vst [vmem:[#allocation2 + $0x48] sm:$0xf] %v491
    %556 = vst [vmem:[#allocation2 + $0x4c] sm:$0xf] %v492
    %557 = vst [vmem:[#allocation2 + $0x50] sm:$0xf] %v493
    %558 = vst [vmem:[#allocation2 + $0x54] sm:$0xf] %v494
    %559 = vst [vmem:[#allocation2 + $0x58] sm:$0xf] %v495
    %560 = vst [vmem:[#allocation2 + $0x5c] sm:$0xf] %v496
    %561 = vst [vmem:[#allocation2 + $0x60] sm:$0xf] %v497
    %562 = vst [vmem:[#allocation2 + $0x64] sm:$0xf] %v498
    %563 = vst [vmem:[#allocation2 + $0x68] sm:$0xf] %v499
    %564 = vst [vmem:[#allocation2 + $0x6c] sm:$0xf] %v500
    %565 = vst [vmem:[#allocation2 + $0x70] sm:$0xf] %v501
    %566 = vst [vmem:[#allocation2 + $0x74] sm:$0xf] %v502
    %567 = vst [vmem:[#allocation2 + $0x78] sm:$0xf] %v503
    %568 = vst [vmem:[#allocation2 + $0x7c] sm:$0xf] %v504
    // Predicated region
    $region14: #{tpu_custom_call.1} parent=1 // pred_check
      _
    $region15: #{tpu_custom_call.1} parent=1 // pred_check_branch
      %570 = sbr.rel (0) target = $region17
    $region16: #{tpu_custom_call.1} parent=1 // pred_region
      %s572 = ssub.s32 2048, 2048
      %573 = vsyncadd [#allocation3], %s572
      %s574 = sshll.u32 [#allocation2], 4
      %s575 = int_to_ptr.vmem [resolvable:$true] %s574
      %580 = dma.vmem_to_hbm [thread:$0]  %s575, 2048, %s3, [#allocation3], 64, 64, 4
    $region17: #{tpu_custom_call.1} parent=1 // pred_fallthru
      _
    // Predicated region
    $region18: #{tpu_custom_call.1} parent=1 // pred_check
      _
    $region19: #{tpu_custom_call.1} parent=1 // pred_check_branch
      %582 = sbr.rel (0) target = $region21
    $region20: #{tpu_custom_call.1} parent=1 // pred_region
      %583 = dma.done [#allocation3], 2048
    $region21: #{tpu_custom_call.1} parent=1 // pred_fallthru
      _
    %584 = vsyncpa [#allocation3], 1

</llo_original>
